<compile_context>
chip_gen: v6e
topology: v6e:2x2x1
jax: 0.10.0
libtpu: 0.0.40
codegen_flags: <defaults>
</compile_context>

<pallas_src>
import jax
import jax.numpy as jnp
from jax.experimental import pallas as pl
from jax.experimental.pallas import tpu as pltpu

_LANES = 128


def _sigmoid_rescaled_kernel(x_ref, scale_ref, min_ref, o_ref):
    # Elementwise hot path: sigmoid (EUP logistic) -> fused scale/shift (VPU).
    x = x_ref[...]
    s = jax.nn.sigmoid(x)                                 # transcendental on EUP slot
    o_ref[...] = s * scale_ref[...] + min_ref[...]        # (1, W) broadcasts over rows


def _round_up(n, m):
    return ((n + m - 1) // m) * m


def sigmoid_rescaled(x, min_vec, max_vec, *, block_rows=2048, min_pallas_elems=0):
    """x: (..., C) float; min_vec/max_vec: (C,) float. Returns same shape/dtype as x."""
    orig_shape = x.shape
    dtype = x.dtype
    C = orig_shape[-1]
    scale = (max_vec - min_vec).astype(dtype)
    mn = min_vec.astype(dtype)

    # Tiny inputs: let XLA fuse it — a pallas_call's per-call overhead dominates.
    if x.size < min_pallas_elems:
        return jax.nn.sigmoid(x) * scale + mn

    if C <= _LANES and _LANES % C == 0:
        # Lane-dense path: 128-wide rows, per-component params tiled across lanes.
        W = _LANES
        reps = _LANES // C
        scale_row = jnp.tile(scale, reps)[None, :]        # (1, 128)
        min_row = jnp.tile(mn, reps)[None, :]             # (1, 128)
    else:
        # Fallback: keep the component axis as the lane axis (still correct,
        # just lane-sparse if C is small and does not divide 128).
        W = C
        scale_row = scale[None, :]
        min_row = mn[None, :]

    flat = x.reshape(-1)                                  # row-major: component = idx % C
    N = flat.shape[0]
    rows = pl.cdiv(N, W)
    tb = min(block_rows, _round_up(rows, 8))              # rows per tile (multiple of 8)
    rows_p = _round_up(rows, tb)                          # pad so the grid divides evenly
    pad = rows_p * W - N
    if pad:
        flat = jnp.pad(flat, (0, pad))
    x2 = flat.reshape(rows_p, W)

    # Explicit VMEM budget: x + out double-buffered (~4 tiles) + small headroom.
    tile_bytes = tb * W * jnp.dtype(dtype).itemsize
    vmem_limit = int(max(4 << 20, 4 * tile_bytes + (2 << 20)))

    out = pl.pallas_call(
        _sigmoid_rescaled_kernel,
        out_shape=jax.ShapeDtypeStruct((rows_p, W), dtype),
        grid=(rows_p // tb,),
        in_specs=[
            pl.BlockSpec((tb, W), lambda i: (i, 0)),      # streamed tiles of x
            pl.BlockSpec((1, W), lambda i: (0, 0)),       # scale: resident, never re-DMA'd
            pl.BlockSpec((1, W), lambda i: (0, 0)),       # min:   resident, never re-DMA'd
        ],
        out_specs=pl.BlockSpec((tb, W), lambda i: (i, 0)),
        compiler_params=pltpu.CompilerParams(
            dimension_semantics=("parallel",),            # shard rows across v7x's 2 TCs
            vmem_limit_bytes=vmem_limit,
        ),
    )(x2, scale_row, min_row)

    return out.reshape(-1)[:N].reshape(orig_shape)


if __name__ == "__main__":
    key = jax.random.PRNGKey(0)

    # Module "parameters": deterministic per-component action ranges (C = 4).
    min_vec = jnp.array([-1.0, 0.0, -2.0, 0.5], dtype=jnp.float32)
    max_vec = jnp.array([1.0, 2.0, 2.0, 1.5], dtype=jnp.float32)

    # Small batch consistent with the module's forward.
    k1, k2 = jax.random.split(key)
    x_small = jax.random.normal(k1, (8, 4), dtype=jnp.float32)
    # Slightly larger batch to exercise the padding / lane-dense reshape path.
    x_big = jax.random.normal(k2, (300, 4), dtype=jnp.float32)

    ok = True
    for x in (x_small, x_big):
        # min_pallas_elems=0 forces the Pallas path even at these toy sizes.
        out = sigmoid_rescaled(x, min_vec, max_vec, min_pallas_elems=0)
        out = jax.block_until_ready(out)
        ref = jax.nn.sigmoid(x) * (max_vec - min_vec) + min_vec
        ok = ok and (out.shape == x.shape) and bool(jnp.allclose(out, ref, atol=1e-5))

    assert ok, "mismatch vs reference"
    print("KERNEL_OK")
</pallas_src>

<mosaic_0001>
module attributes {stable_mosaic.version = 11 : i64} {
  func.func @_sigmoid_rescaled_kernel(%arg0: i32, %arg1: memref<8x128xf32, #tpu.memory_space<vmem>>, %arg2: memref<1x128xf32, #tpu.memory_space<vmem>>, %arg3: memref<1x128xf32, #tpu.memory_space<vmem>>, %arg4: memref<8x128xf32, #tpu.memory_space<vmem>>) attributes {dimension_semantics = [#tpu.dimension_semantics<parallel>], iteration_bounds = array<i64: 1>, scalar_prefetch = 0 : i64, scratch_operands = 0 : i64, tpu.core_type = #tpu.core_type<tc>, window_params = [{transform_indices = @transform_0, window_bounds = array<i64: 8, 128>}, {pipeline_mode = #tpu.pipeline_mode<synchronous>, transform_indices = @transform_1, window_bounds = array<i64: 1, 128>}, {pipeline_mode = #tpu.pipeline_mode<synchronous>, transform_indices = @transform_2, window_bounds = array<i64: 1, 128>}, {transform_indices = @transform_3, window_bounds = array<i64: 8, 128>}]} {
    %c0 = arith.constant 0 : index
    %c0_0 = arith.constant 0 : index
    %0 = vector.load %arg1[%c0, %c0_0] : memref<8x128xf32, #tpu.memory_space<vmem>>, vector<8x128xf32>
    %1 = arith.negf %0 : vector<8x128xf32>
    %2 = math.exp %1 : vector<8x128xf32>
    %cst = arith.constant 1.000000e+00 : f32
    %3 = vector.broadcast %cst : f32 to vector<8x128xf32>
    %4 = arith.addf %3, %2 : vector<8x128xf32>
    %5 = arith.divf %3, %4 : vector<8x128xf32>
    %c0_1 = arith.constant 0 : index
    %c0_2 = arith.constant 0 : index
    %6 = vector.load %arg2[%c0_1, %c0_2] : memref<1x128xf32, #tpu.memory_space<vmem>>, vector<1x128xf32>
    %7 = vector.broadcast %6 : vector<1x128xf32> to vector<8x128xf32>
    %8 = arith.mulf %5, %7 : vector<8x128xf32>
    %c0_3 = arith.constant 0 : index
    %c0_4 = arith.constant 0 : index
    %9 = vector.load %arg3[%c0_3, %c0_4] : memref<1x128xf32, #tpu.memory_space<vmem>>, vector<1x128xf32>
    %10 = vector.broadcast %9 : vector<1x128xf32> to vector<8x128xf32>
    %11 = arith.addf %8, %10 : vector<8x128xf32>
    %c0_5 = arith.constant 0 : index
    %c0_6 = arith.constant 0 : index
    %12 = vector.load %arg4[%c0_5, %c0_6] : memref<8x128xf32, #tpu.memory_space<vmem>>, vector<8x128xf32>
    tpu.vector_store %arg4[%c0_5, %c0_6], %11 {strides = array<i32>} : memref<8x128xf32, #tpu.memory_space<vmem>>, vector<8x128xf32>,
    return
  }
  func.func @transform_0(%arg0: i32) -> (i32, i32) {
    %c0_i32 = arith.constant 0 : i32
    %c0_i32_0 = arith.constant 0 : i32
    return %arg0, %c0_i32 : i32, i32
  }
  func.func @transform_1(%arg0: i32) -> (i32, i32) {
    %c0_i32 = arith.constant 0 : i32
    %c0_i32_0 = arith.constant 0 : i32
    %c0_i32_1 = arith.constant 0 : i32
    return %c0_i32, %c0_i32_0 : i32, i32
  }
  func.func @transform_2(%arg0: i32) -> (i32, i32) {
    %c0_i32 = arith.constant 0 : i32
    %c0_i32_0 = arith.constant 0 : i32
    %c0_i32_1 = arith.constant 0 : i32
    return %c0_i32, %c0_i32_0 : i32, i32
  }
  func.func @transform_3(%arg0: i32) -> (i32, i32) {
    %c0_i32 = arith.constant 0 : i32
    %c0_i32_0 = arith.constant 0 : i32
    return %arg0, %c0_i32 : i32, i32
  }
}

</mosaic_0001>

<llo_original>
// kernel: tpu_custom_call.1
$region0: #{tpu_custom_call.1}
  #allocation0 [shape = 'u32[]', space=smem, size = 0x4, offset = 0x4, fixed_abs, tag = 'smem constant byte address 0x4 - core index']
  #allocation1 [shape = 'u32[144,128]{1,0:T(1,128)}', space=vmem, size = 0x12000, scoped, tag = 'internal scratch']
  %s0 = inlined_call_operand.hbm [shape: f32[8,128], index: 0, kind: input, shape index: {}]
  %s1 = inlined_call_operand.vmem [shape: f32[1,128], index: 1, kind: input, shape index: {}]
  %s2 = inlined_call_operand.vmem [shape: f32[1,128], index: 2, kind: input, shape index: {}]
  %s3 = inlined_call_operand.hbm [shape: f32[8,128], index: 3, kind: output, shape index: {}]
  %s4 = sld [smem:[#allocation0]]
  $region26: #{tpu_custom_call.1} parent=0
    _
  %s6 = ssub.s32 1, %s4
  %s7 = scalar_select 0, %s6, %s4
  $region1: #{tpu_custom_call.1} parent=0
    #allocation2 [shape = 'u8[4096]{0}', space=vmem, size = 0x1000, scoped, tag = 'input window, operand 0, single buffered']
    #allocation3 [shape = 's32[1]{0}', space=sflag, size = 0x4, scoped, tag = 'scoped memory for tpu_custom_call.1']
    #allocation4 [shape = 's32[1]{0}', space=sflag, size = 0x4, scoped, tag = 'scoped memory for tpu_custom_call.1']
    #allocation5 [shape = 'u8[4096]{0}', space=vmem, size = 0x1000, scoped, tag = 'output window, operand 0, single buffered']
    %8 = vsyncpa [#allocation3], 0
    %9 = vsyncpa [#allocation4], 0
    // Predicated region
    $region2: #{tpu_custom_call.1} parent=1 // pred_check
      _
    $region3: #{tpu_custom_call.1} parent=1 // pred_check_branch
      %11 = sbr.rel (0) target = $region5
    $region4: #{tpu_custom_call.1} parent=1 // pred_region
      %s13 = ssub.s32 128, 128
      %14 = vsyncadd [#allocation3], %s13
      %s16 = sshll.u32 [#allocation2], 4
      %s17 = int_to_ptr.vmem [resolvable:$true] %s16
      %19 = dma.hbm_to_vmem [thread:$0]  %s0, 128, %s17, [#allocation3]
    $region5: #{tpu_custom_call.1} parent=1 // pred_fallthru
      _
    // Predicated region
    $region6: #{tpu_custom_call.1} parent=1 // pred_check
      _
    $region7: #{tpu_custom_call.1} parent=1 // pred_check_branch
      %21 = sbr.rel (0) target = $region9
    $region8: #{tpu_custom_call.1} parent=1 // pred_region
      _
    $region9: #{tpu_custom_call.1} parent=1 // pred_fallthru
      _
    // Predicated region
    $region10: #{tpu_custom_call.1} parent=1 // pred_check
      _
    $region11: #{tpu_custom_call.1} parent=1 // pred_check_branch
      %23 = sbr.rel (0) target = $region13
    $region12: #{tpu_custom_call.1} parent=1 // pred_region
      _
    $region13: #{tpu_custom_call.1} parent=1 // pred_fallthru
      _
    // Predicated region
    $region14: #{tpu_custom_call.1} parent=1 // pred_check
      _
    $region15: #{tpu_custom_call.1} parent=1 // pred_check_branch
      %25 = sbr.rel (0) target = $region17
    $region16: #{tpu_custom_call.1} parent=1 // pred_region
      %26 = dma.done [#allocation3], 128
    $region17: #{tpu_custom_call.1} parent=1 // pred_fallthru
      _
    %v27 = vld [vmem:[#allocation2] sm:$0xff]
    %v28 = vxor.u32 %v27, 2147483648
    %v29 = vmul.f32 %v28, 1.442695
    %v30 = vpow.pop %v29
    %v31 = vadd.f32 %v30, 1.0
    %v32 = vrcp.pop %v31
    %v33 = vmul.f32 1.0, %v32
    %v34 = vld [vmem:[%s1] sm:$0x1]
    %v36 = vlaneseq
    %v37 = vshrl.u32 %v36, 7
    %v38 = vsub.s32 0, %v37
    %v39 = vrot.slane %v34, %v38
    %v41 = vmul.f32 %v33, %v39
    %v42 = vld [vmem:[%s2] sm:$0x1]
    %v44 = vlaneseq
    %v45 = vshrl.u32 %v44, 7
    %v46 = vsub.s32 0, %v45
    %v47 = vrot.slane %v42, %v46
    %v49 = vadd.f32 %v41, %v47
    %50 = vst [vmem:[#allocation5] sm:$0xff] %v49
    // Predicated region
    $region18: #{tpu_custom_call.1} parent=1 // pred_check
      _
    $region19: #{tpu_custom_call.1} parent=1 // pred_check_branch
      %52 = sbr.rel (0) target = $region21
    $region20: #{tpu_custom_call.1} parent=1 // pred_region
      %s54 = ssub.s32 128, 128
      %55 = vsyncadd [#allocation4], %s54
      %s57 = sshll.u32 [#allocation5], 4
      %s58 = int_to_ptr.vmem [resolvable:$true] %s57
      %60 = dma.vmem_to_hbm [thread:$0]  %s58, 128, %s3, [#allocation4]
    $region21: #{tpu_custom_call.1} parent=1 // pred_fallthru
      _
    // Predicated region
    $region22: #{tpu_custom_call.1} parent=1 // pred_check
      _
    $region23: #{tpu_custom_call.1} parent=1 // pred_check_branch
      %62 = sbr.rel (0) target = $region25
    $region24: #{tpu_custom_call.1} parent=1 // pred_region
      %63 = dma.done [#allocation4], 128
    $region25: #{tpu_custom_call.1} parent=1 // pred_fallthru
      _
    %64 = vsyncpa [#allocation3], 1
    %65 = vsyncpa [#allocation4], 1

</llo_original>
